<compile_context>
chip_gen: v5e
topology: v5e:2x2
jax: 0.10.0
libtpu: 0.0.40
codegen_flags: <defaults>
</compile_context>

<pallas_src>
import functools

import jax
import jax.numpy as jnp
from jax.experimental import pallas as pl
from jax.experimental.pallas import tpu as pltpu


def _round_up(x, m):
    return ((x + m - 1) // m) * m


def _pad2(a, rows, cols):
    """Zero-pad a 2-D array up to (rows, cols) (trailing pad only)."""
    pr, pc = rows - a.shape[0], cols - a.shape[1]
    if pr == 0 and pc == 0:
        return a
    return jnp.pad(a, ((0, pr), (0, pc)))


# ---------------------------------------------------------------------------
# Generation-aware VMEM budget (v5e/v6e: 128 MiB per TC, v7x: 64 MiB per TC).
try:
    _VMEM_CAP = int(pltpu.get_tpu_info().vmem_capacity_bytes)
except Exception:
    _VMEM_CAP = 64 * 1024 * 1024                   # conservative (v7x) fallback
_VMEM_BUDGET = max(32 * 1024 * 1024,
                   min(int(_VMEM_CAP * 0.75), 100 * 1024 * 1024))

BLOCK_HIDDEN = 512                                  # default hidden-slab width


def _default_block_rows():
    # v5e/v6e (128 MiB VMEM, 1 TC): need ~650 flops per weight byte -> big tiles.
    # v7x (64 MiB VMEM, 2 TCs, ~3.2 TB/s): compute-bound from ~384-512 rows.
    return 768 if _VMEM_CAP >= 100 * 1024 * 1024 else 512


def _vmem_estimate(bm, c_pad, th):
    """Approximate VMEM for one grid step (double-buffered specs + hidden)."""
    x_buf = 2 * bm * c_pad * 4                      # f32 activation row tile
    o_buf = 2 * bm * c_pad * 4                      # f32 output tile
    w_buf = 2 * 2 * c_pad * th * 2                  # w1 + w2 slabs (bf16)
    b_buf = 2 * (th + c_pad) * 4                    # biases
    hid = bm * th * (4 + 2)                         # f32 + bf16 hidden interm.
    return x_buf + o_buf + w_buf + b_buf + hid


# ---------------------------------------------------------------------------
# Kernel: grid = (row_tiles, hidden_tiles); hidden axis is the reduction axis.
#   x_ref:  (bm, Cp)  f32   row tile of tokens (resident across h axis)
#   w1_ref: (Cp, th)  bf16  slab of first linear weight
#   b1_ref: (1, th)   f32
#   w2_ref: (th, Cp)  bf16  slab of second linear weight
#   b2_ref: (1, Cp)   f32
#   o_ref:  (bm, Cp)  f32   output tile; resident across h axis -> accumulator
def _ffn_kernel(x_ref, w1_ref, b1_ref, w2_ref, b2_ref, o_ref):
    h_idx = pl.program_id(1)

    x = x_ref[...].astype(jnp.bfloat16)             # in-kernel cast (VPU filler)
    hidden = jnp.dot(x, w1_ref[...], preferred_element_type=jnp.float32)
    hidden = jnp.maximum(hidden + b1_ref[...], 0.0)
    part = jnp.dot(hidden.astype(jnp.bfloat16), w2_ref[...],
                   preferred_element_type=jnp.float32)

    @pl.when(h_idx == 0)
    def _():
        o_ref[...] = part

    @pl.when(h_idx > 0)
    def _():
        o_ref[...] += part

    @pl.when(h_idx == pl.num_programs(1) - 1)
    def _():
        # Dropout(eval) == identity.
        o_ref[...] += b2_ref[...]


# ---------------------------------------------------------------------------
def prepare_params(w1, b1, w2, b2, *, block_hidden=BLOCK_HIDDEN):
    """Pad + cast parameters ONCE. Store the result; reuse across calls.

    w1: (C, H), b1: (H,)/(1,H), w2: (H, C), b2: (C,)/(1,C)  — all f32.
    Returns (w1p bf16 (Cp,Hp), b1p f32 (1,Hp), w2p bf16 (Hp,Cp), b2p f32 (1,Cp)).
    """
    C, H = w1.shape
    c_pad = _round_up(C, 128)
    bh = _round_up(block_hidden, 128)
    h128 = _round_up(H, 128)
    h_pad = h128 if h128 <= bh else _round_up(H, bh)

    w1p = _pad2(w1, c_pad, h_pad).astype(jnp.bfloat16)
    b1p = _pad2(jnp.asarray(b1).reshape(1, -1), 1, h_pad).astype(jnp.float32)
    w2p = _pad2(w2, h_pad, c_pad).astype(jnp.bfloat16)
    b2p = _pad2(jnp.asarray(b2).reshape(1, -1), 1, c_pad).astype(jnp.float32)
    return w1p, b1p, w2p, b2p


@functools.partial(
    jax.jit, static_argnames=("block_rows", "block_hidden", "weight_resident"))
def feed_forward(x, w1p, b1p, w2p, b2p, *, block_rows=None,
                 block_hidden=BLOCK_HIDDEN, weight_resident=None):
    """x: (..., C) float32; weights from prepare_params. Returns (..., C) f32."""
    orig_shape = x.shape
    C = orig_shape[-1]
    N = 1
    for d in orig_shape[:-1]:
        N *= d
    C_pad, H_pad = w1p.shape

    if block_rows is None:
        block_rows = _default_block_rows()

    # Clamp the row tile to the problem (decode / tiny-batch friendly).
    bm = max(16, min(block_rows, _round_up(N, 16)))

    # Hidden-slab width: weight-resident fast path when everything fits VMEM,
    # otherwise stream hidden slabs of width >= block_hidden (no gcd collapse).
    bh = _round_up(block_hidden, 128)
    if weight_resident is None:
        weight_resident = _vmem_estimate(bm, C_pad, H_pad) <= _VMEM_BUDGET
    if weight_resident:
        th = H_pad
    else:
        th = min(H_pad, bh)
        while _vmem_estimate(bm, C_pad, th) > _VMEM_BUDGET and bm > 16:
            bm = max(16, bm // 2)
    assert H_pad % th == 0

    N_pad = _round_up(N, bm)
    x2d = _pad2(x.reshape(N, C), N_pad, C_pad)       # f32; bf16 cast in-kernel

    n_row_tiles = N_pad // bm
    n_h_tiles = H_pad // th
    grid = (n_row_tiles, n_h_tiles)

    weight_bytes = (w1p.size + w2p.size) * 2         # bf16
    weight_passes = 1 if n_h_tiles == 1 else n_row_tiles
    cost = pl.CostEstimate(
        flops=4 * N_pad * C_pad * H_pad,             # two matmuls, 2 flops/MAC
        transcendentals=0,
        bytes_accessed=(2 * N_pad * C_pad * 4        # x read + out write (f32)
                        + weight_passes * weight_bytes
                        + (b1p.size + b2p.size) * 4),
    )

    out2d = pl.pallas_call(
        _ffn_kernel,
        out_shape=jax.ShapeDtypeStruct((N_pad, C_pad), jnp.float32),
        grid_spec=pltpu.PrefetchScalarGridSpec(
            num_scalar_prefetch=0,
            grid=grid,
            in_specs=[
                pl.BlockSpec((bm, C_pad), lambda i, h: (i, 0)),   # x rows
                pl.BlockSpec((C_pad, th), lambda i, h: (0, h)),   # w1 slab
                pl.BlockSpec((1, th),     lambda i, h: (0, h)),   # b1 slab
                pl.BlockSpec((th, C_pad), lambda i, h: (h, 0)),   # w2 slab
                pl.BlockSpec((1, C_pad),  lambda i, h: (0, 0)),   # b2
            ],
            out_specs=pl.BlockSpec((bm, C_pad), lambda i, h: (i, 0)),
        ),
        compiler_params=pltpu.CompilerParams(
            dimension_semantics=("parallel", "arbitrary"),
            vmem_limit_bytes=_VMEM_BUDGET,
        ),
        cost_estimate=cost,
    )(x2d, w1p, b1p, w2p, b2p)

    return out2d[:N, :C].reshape(orig_shape)


# ---------------------------------------------------------------------------
def init_params(key, n_emb):
    """Mirror nn.Linear init: U(-1/sqrt(fan_in), 1/sqrt(fan_in)).

    Weights are returned already transposed to (in_features, out_features).
    """
    h = 4 * n_emb
    k1, k2, k3, k4 = jax.random.split(key, 4)
    bound1 = 1.0 / jnp.sqrt(n_emb)
    bound2 = 1.0 / jnp.sqrt(h)
    w1 = jax.random.uniform(k1, (n_emb, h), jnp.float32, -bound1, bound1)
    b1 = jax.random.uniform(k2, (1, h), jnp.float32, -bound1, bound1)
    w2 = jax.random.uniform(k3, (h, n_emb), jnp.float32, -bound2, bound2)
    b2 = jax.random.uniform(k4, (1, n_emb), jnp.float32, -bound2, bound2)
    return w1, b1, w2, b2


def _reference(x, w1, b1, w2, b2):
    n = x.shape[-1]
    y = jnp.maximum(x.reshape(-1, n) @ w1 + b1, 0.0) @ w2 + b2
    return y.reshape(x.shape)


if __name__ == "__main__":
    key = jax.random.PRNGKey(0)

    # --- Test 1: small shapes, auto (weight-resident) path. ---------------
    n_emb, B, T = 32, 2, 8
    kx, kp, key = jax.random.split(key, 3)
    x = jax.random.normal(kx, (B, T, n_emb), jnp.float32)
    w1, b1, w2, b2 = init_params(kp, n_emb)
    params = prepare_params(w1, b1, w2, b2)

    out = feed_forward(x, *params)
    jax.block_until_ready(out)
    ref = _reference(x, w1, b1, w2, b2)
    assert out.shape == (B, T, n_emb)
    assert jnp.allclose(out, ref, atol=5e-2, rtol=5e-2), (
        float(jnp.max(jnp.abs(out - ref))))

    # --- Test 2: force the streaming (multi hidden-slab) path. ------------
    n_emb2 = 64                                       # H = 256 -> two 128 slabs
    kx2, kp2 = jax.random.split(key)
    x2 = jax.random.normal(kx2, (B, T, n_emb2), jnp.float32)
    w1b, b1b, w2b, b2b = init_params(kp2, n_emb2)
    params2 = prepare_params(w1b, b1b, w2b, b2b, block_hidden=128)

    out2 = feed_forward(x2, *params2, block_hidden=128, weight_resident=False)
    jax.block_until_ready(out2)
    ref2 = _reference(x2, w1b, b1b, w2b, b2b)
    assert out2.shape == (B, T, n_emb2)
    assert jnp.allclose(out2, ref2, atol=5e-2, rtol=5e-2), (
        float(jnp.max(jnp.abs(out2 - ref2))))

    print("KERNEL_OK")
</pallas_src>

<mosaic_0001>
module attributes {stable_mosaic.version = 11 : i64} {
  func.func @_ffn_kernel(%arg0: i32, %arg1: i32, %arg2: memref<16x128xf32, #tpu.memory_space<vmem>>, %arg3: memref<128x128xbf16, #tpu.memory_space<vmem>>, %arg4: memref<1x128xf32, #tpu.memory_space<vmem>>, %arg5: memref<128x128xbf16, #tpu.memory_space<vmem>>, %arg6: memref<1x128xf32, #tpu.memory_space<vmem>>, %arg7: memref<16x128xf32, #tpu.memory_space<vmem>>) attributes {dimension_semantics = [#tpu.dimension_semantics<parallel>, #tpu.dimension_semantics<arbitrary>], iteration_bounds = array<i64: 1, 1>, scalar_prefetch = 0 : i64, scratch_operands = 0 : i64, tpu.core_type = #tpu.core_type<tc>, window_params = [{transform_indices = @transform_0, window_bounds = array<i64: 16, 128>}, {transform_indices = @transform_1, window_bounds = array<i64: 128, 128>}, {transform_indices = @transform_2, window_bounds = array<i64: 1, 128>}, {transform_indices = @transform_3, window_bounds = array<i64: 128, 128>}, {pipeline_mode = #tpu.pipeline_mode<synchronous>, transform_indices = @transform_4, window_bounds = array<i64: 1, 128>}, {transform_indices = @transform_5, window_bounds = array<i64: 16, 128>}]} {
    %c0 = arith.constant 0 : index
    %c0_0 = arith.constant 0 : index
    %0 = vector.load %arg2[%c0, %c0_0] : memref<16x128xf32, #tpu.memory_space<vmem>>, vector<16x128xf32>
    %1 = arith.truncf %0 : vector<16x128xf32> to vector<16x128xbf16>
    %c0_1 = arith.constant 0 : index
    %c0_2 = arith.constant 0 : index
    %2 = vector.load %arg3[%c0_1, %c0_2] : memref<128x128xbf16, #tpu.memory_space<vmem>>, vector<128x128xbf16>
    %cst = arith.constant dense<0.000000e+00> : vector<16x128xf32>
    %3 = tpu.matmul %1, %2, %cst {dimension_numbers = #tpu.dot_dimension_numbers<[1], [0], [0], [1], [0, 0, 1, 1], [], []>} : vector<16x128xbf16>, vector<128x128xbf16>, vector<16x128xf32> -> vector<16x128xf32>
    %c0_3 = arith.constant 0 : index
    %c0_4 = arith.constant 0 : index
    %4 = vector.load %arg4[%c0_3, %c0_4] : memref<1x128xf32, #tpu.memory_space<vmem>>, vector<1x128xf32>
    %5 = vector.broadcast %4 : vector<1x128xf32> to vector<16x128xf32>
    %6 = arith.addf %3, %5 : vector<16x128xf32>
    %cst_5 = arith.constant 0.000000e+00 : f32
    %7 = vector.broadcast %cst_5 : f32 to vector<16x128xf32>
    %8 = arith.maximumf %6, %7 : vector<16x128xf32>
    %9 = arith.truncf %8 : vector<16x128xf32> to vector<16x128xbf16>
    %c0_6 = arith.constant 0 : index
    %c0_7 = arith.constant 0 : index
    %10 = vector.load %arg5[%c0_6, %c0_7] : memref<128x128xbf16, #tpu.memory_space<vmem>>, vector<128x128xbf16>
    %cst_8 = arith.constant dense<0.000000e+00> : vector<16x128xf32>
    %11 = tpu.matmul %9, %10, %cst_8 {dimension_numbers = #tpu.dot_dimension_numbers<[1], [0], [0], [1], [0, 0, 1, 1], [], []>} : vector<16x128xbf16>, vector<128x128xbf16>, vector<16x128xf32> -> vector<16x128xf32>
    %c0_i32 = arith.constant 0 : i32
    %12 = arith.cmpi eq, %arg1, %c0_i32 : i32
    %13 = arith.extui %12 : i1 to i32
    %c0_i32_9 = arith.constant 0 : i32
    %14 = arith.cmpi ne, %13, %c0_i32_9 : i32
    scf.if %14 {
      %c0_14 = arith.constant 0 : index
      %c0_15 = arith.constant 0 : index
      %21 = vector.load %arg7[%c0_14, %c0_15] : memref<16x128xf32, #tpu.memory_space<vmem>>, vector<16x128xf32>
      tpu.vector_store %arg7[%c0_14, %c0_15], %11 {strides = array<i32>} : memref<16x128xf32, #tpu.memory_space<vmem>>, vector<16x128xf32>,
    } else {
    }
    %c0_i32_10 = arith.constant 0 : i32
    %15 = arith.cmpi sgt, %arg1, %c0_i32_10 : i32
    %16 = arith.extui %15 : i1 to i32
    %c0_i32_11 = arith.constant 0 : i32
    %17 = arith.cmpi ne, %16, %c0_i32_11 : i32
    scf.if %17 {
      %c0_14 = arith.constant 0 : index
      %c0_15 = arith.constant 0 : index
      %21 = vector.load %arg7[%c0_14, %c0_15] : memref<16x128xf32, #tpu.memory_space<vmem>>, vector<16x128xf32>
      %22 = arith.addf %21, %11 : vector<16x128xf32>
      %c0_16 = arith.constant 0 : index
      %c0_17 = arith.constant 0 : index
      %23 = vector.load %arg7[%c0_16, %c0_17] : memref<16x128xf32, #tpu.memory_space<vmem>>, vector<16x128xf32>
      tpu.vector_store %arg7[%c0_16, %c0_17], %22 {strides = array<i32>} : memref<16x128xf32, #tpu.memory_space<vmem>>, vector<16x128xf32>,
    } else {
    }
    %c0_i32_12 = arith.constant 0 : i32
    %18 = arith.cmpi eq, %arg1, %c0_i32_12 : i32
    %19 = arith.extui %18 : i1 to i32
    %c0_i32_13 = arith.constant 0 : i32
    %20 = arith.cmpi ne, %19, %c0_i32_13 : i32
    scf.if %20 {
      %c0_14 = arith.constant 0 : index
      %c0_15 = arith.constant 0 : index
      %21 = vector.load %arg7[%c0_14, %c0_15] : memref<16x128xf32, #tpu.memory_space<vmem>>, vector<16x128xf32>
      %c0_16 = arith.constant 0 : index
      %c0_17 = arith.constant 0 : index
      %22 = vector.load %arg6[%c0_16, %c0_17] : memref<1x128xf32, #tpu.memory_space<vmem>>, vector<1x128xf32>
      %23 = vector.broadcast %22 : vector<1x128xf32> to vector<16x128xf32>
      %24 = arith.addf %21, %23 : vector<16x128xf32>
      %c0_18 = arith.constant 0 : index
      %c0_19 = arith.constant 0 : index
      %25 = vector.load %arg7[%c0_18, %c0_19] : memref<16x128xf32, #tpu.memory_space<vmem>>, vector<16x128xf32>
      tpu.vector_store %arg7[%c0_18, %c0_19], %24 {strides = array<i32>} : memref<16x128xf32, #tpu.memory_space<vmem>>, vector<16x128xf32>,
    } else {
    }
    return
  }
  func.func @transform_0(%arg0: i32, %arg1: i32) -> (i32, i32) {
    %c0_i32 = arith.constant 0 : i32
    %c0_i32_0 = arith.constant 0 : i32
    return %arg0, %c0_i32 : i32, i32
  }
  func.func @transform_1(%arg0: i32, %arg1: i32) -> (i32, i32) {
    %c0_i32 = arith.constant 0 : i32
    %c0_i32_0 = arith.constant 0 : i32
    return %c0_i32, %arg1 : i32, i32
  }
  func.func @transform_2(%arg0: i32, %arg1: i32) -> (i32, i32) {
    %c0_i32 = arith.constant 0 : i32
    %c0_i32_0 = arith.constant 0 : i32
    return %c0_i32, %arg1 : i32, i32
  }
  func.func @transform_3(%arg0: i32, %arg1: i32) -> (i32, i32) {
    %c0_i32 = arith.constant 0 : i32
    %c0_i32_0 = arith.constant 0 : i32
    return %arg1, %c0_i32 : i32, i32
  }
  func.func @transform_4(%arg0: i32, %arg1: i32) -> (i32, i32) {
    %c0_i32 = arith.constant 0 : i32
    %c0_i32_0 = arith.constant 0 : i32
    %c0_i32_1 = arith.constant 0 : i32
    return %c0_i32, %c0_i32_0 : i32, i32
  }
  func.func @transform_5(%arg0: i32, %arg1: i32) -> (i32, i32) {
    %c0_i32 = arith.constant 0 : i32
    %c0_i32_0 = arith.constant 0 : i32
    return %arg0, %c0_i32 : i32, i32
  }
}

</mosaic_0001>

<llo_original>
// kernel: feed_forward.1
$region0: #{feed_forward.1}
  #allocation0 [shape = 'u32[]', space=smem, size = 0x4, offset = 0x4, fixed_abs, tag = 'smem constant byte address 0x4 - core index']
  #allocation1 [shape = 'u32[72,128]{1,0:T(1,128)}', space=vmem, size = 0x9000, scoped, tag = 'internal scratch']
  %s0 = inlined_call_operand.vmem [shape: f32[16,128], index: 0, kind: input, shape index: {}]
  %s1 = inlined_call_operand.hbm [shape: bf16[128,128], index: 1, kind: input, shape index: {}]
  %s2 = inlined_call_operand.vmem [shape: f32[1,128], index: 2, kind: input, shape index: {}]
  %s3 = inlined_call_operand.hbm [shape: bf16[128,128], index: 3, kind: input, shape index: {}]
  %s4 = inlined_call_operand.vmem [shape: f32[1,128], index: 4, kind: input, shape index: {}]
  %s5 = inlined_call_operand.vmem [shape: f32[16,128], index: 5, kind: output, shape index: {}]
  %s6 = sld [smem:[#allocation0]]
  $region50: #{feed_forward.1} parent=0
    _
  %s8 = ssub.s32 1, %s6
  %s9 = scalar_select 0, %s8, %s6
  $region1: #{feed_forward.1} parent=0
    #allocation2 [shape = 'u8[32768]{0}', space=vmem, size = 0x8000, scoped, tag = 'input window, operand 1, single buffered']
    #allocation3 [shape = 's32[1]{0}', space=sflag, size = 0x4, scoped, tag = 'scoped memory for feed_forward.1']
    #allocation4 [shape = 'u8[32768]{0}', space=vmem, size = 0x8000, scoped, tag = 'input window, operand 3, single buffered']
    #allocation5 [shape = 's32[1]{0}', space=sflag, size = 0x4, scoped, tag = 'scoped memory for feed_forward.1']
    %10 = vsyncpa [#allocation3], 0
    %11 = vsyncpa [#allocation5], 0
    // Predicated region
    $region2: #{feed_forward.1} parent=1 // pred_check
      _
    $region3: #{feed_forward.1} parent=1 // pred_check_branch
      %13 = sbr.rel (0) target = $region5
    $region4: #{feed_forward.1} parent=1 // pred_region
      _
    $region5: #{feed_forward.1} parent=1 // pred_fallthru
      _
    // Predicated region
    $region6: #{feed_forward.1} parent=1 // pred_check
      _
    $region7: #{feed_forward.1} parent=1 // pred_check_branch
      %15 = sbr.rel (0) target = $region9
    $region8: #{feed_forward.1} parent=1 // pred_region
      %17 = vsyncadd [#allocation3], 0
      %s18 = sshll.u32 %s1, 4
      %s19 = int_to_ptr.hbm [resolvable:$true] %s18
      %s20 = sshll.u32 [#allocation2], 4
      %s21 = int_to_ptr.vmem [resolvable:$true] %s20
      %26 = dma.hbm_to_vmem [thread:$0]  %s19, 1024, %s21, [#allocation3], 64, 64, 4
    $region9: #{feed_forward.1} parent=1 // pred_fallthru
      _
    // Predicated region
    $region10: #{feed_forward.1} parent=1 // pred_check
      _
    $region11: #{feed_forward.1} parent=1 // pred_check_branch
      %28 = sbr.rel (0) target = $region13
    $region12: #{feed_forward.1} parent=1 // pred_region
      _
    $region13: #{feed_forward.1} parent=1 // pred_fallthru
      _
    // Predicated region
    $region14: #{feed_forward.1} parent=1 // pred_check
      _
    $region15: #{feed_forward.1} parent=1 // pred_check_branch
      %30 = sbr.rel (0) target = $region17
    $region16: #{feed_forward.1} parent=1 // pred_region
      %32 = vsyncadd [#allocation5], 0
      %s33 = sshll.u32 %s3, 4
      %s34 = int_to_ptr.hbm [resolvable:$true] %s33
      %s35 = sshll.u32 [#allocation4], 4
      %s36 = int_to_ptr.vmem [resolvable:$true] %s35
      %41 = dma.hbm_to_vmem [thread:$0]  %s34, 1024, %s36, [#allocation5], 64, 64, 4
    $region17: #{feed_forward.1} parent=1 // pred_fallthru
      _
    // Predicated region
    $region18: #{feed_forward.1} parent=1 // pred_check
      _
    $region19: #{feed_forward.1} parent=1 // pred_check_branch
      %43 = sbr.rel (0) target = $region21
    $region20: #{feed_forward.1} parent=1 // pred_region
      _
    $region21: #{feed_forward.1} parent=1 // pred_fallthru
      _
    // Predicated region
    $region22: #{feed_forward.1} parent=1 // pred_check
      _
    $region23: #{feed_forward.1} parent=1 // pred_check_branch
      %45 = sbr.rel (0) target = $region25
    $region24: #{feed_forward.1} parent=1 // pred_region
      %47 = dma.done [#allocation3], 1024
    $region25: #{feed_forward.1} parent=1 // pred_fallthru
      _
    // Predicated region
    $region26: #{feed_forward.1} parent=1 // pred_check
      _
    $region27: #{feed_forward.1} parent=1 // pred_check_branch
      %49 = sbr.rel (0) target = $region29
    $region28: #{feed_forward.1} parent=1 // pred_region
      %51 = dma.done [#allocation5], 1024
    $region29: #{feed_forward.1} parent=1 // pred_fallthru
      _
    %v52 = vld [vmem:[%s0] sm:$0xff]
    %v53 = vld [vmem:[%s0 + $0x8] sm:$0xff]
    %v54 = vpack.c.bf16 %v53, %v52
    %v55 = vld [vmem:[#allocation2] sm:$0xf]
    %v56 = vld [vmem:[#allocation2 + $0x4] sm:$0xf]
    %v57 = vld [vmem:[#allocation2 + $0x8] sm:$0xf]
    %v58 = vld [vmem:[#allocation2 + $0xc] sm:$0xf]
    %v59 = vld [vmem:[#allocation2 + $0x10] sm:$0xf]
    %v60 = vld [vmem:[#allocation2 + $0x14] sm:$0xf]
    %v61 = vld [vmem:[#allocation2 + $0x18] sm:$0xf]
    %v62 = vld [vmem:[#allocation2 + $0x1c] sm:$0xf]
    %v63 = vld [vmem:[#allocation2 + $0x20] sm:$0xf]
    %v64 = vld [vmem:[#allocation2 + $0x24] sm:$0xf]
    %v65 = vld [vmem:[#allocation2 + $0x28] sm:$0xf]
    %v66 = vld [vmem:[#allocation2 + $0x2c] sm:$0xf]
    %v67 = vld [vmem:[#allocation2 + $0x30] sm:$0xf]
    %v68 = vld [vmem:[#allocation2 + $0x34] sm:$0xf]
    %v69 = vld [vmem:[#allocation2 + $0x38] sm:$0xf]
    %v70 = vld [vmem:[#allocation2 + $0x3c] sm:$0xf]
    %v71 = vld [vmem:[%s2] sm:$0x1]
    %v73 = vperm.slane %v71, 0
    %v91 = vunpack.c.l.b16 %v55
    %v92 = vunpack.c.l.b16 %v56
    %v93 = vunpack.c.l.b16 %v57
    %v94 = vunpack.c.l.b16 %v58
    %v95 = vunpack.c.l.b16 %v59
    %v96 = vunpack.c.l.b16 %v60
    %v97 = vunpack.c.l.b16 %v61
    %v98 = vunpack.c.l.b16 %v62
    %v99 = vunpack.c.l.b16 %v63
    %v100 = vunpack.c.l.b16 %v64
    %v101 = vunpack.c.l.b16 %v65
    %v102 = vunpack.c.l.b16 %v66
    %v103 = vunpack.c.l.b16 %v67
    %v104 = vunpack.c.l.b16 %v68
    %v105 = vunpack.c.l.b16 %v69
    %v106 = vunpack.c.l.b16 %v70
    %v107 = vpack.c.b16 %v92, %v91
    %v108 = vpack.c.b16 %v94, %v93
    %v109 = vpack.c.b16 %v96, %v95
    %v110 = vpack.c.b16 %v98, %v97
    %v111 = vpack.c.b16 %v100, %v99
    %v112 = vpack.c.b16 %v102, %v101
    %v113 = vpack.c.b16 %v104, %v103
    %v114 = vpack.c.b16 %v106, %v105
    %123 = vmatpush.bf16.msra.mxu0 %v114
    %124 = vmatpush.bf16.msra.mxu0 %v113
    %125 = vmatpush.bf16.msra.mxu0 %v112
    %126 = vmatpush.bf16.msra.mxu0 %v111
    %127 = vmatpush.bf16.msra.mxu0 %v110
    %128 = vmatpush.bf16.msra.mxu0 %v109
    %129 = vmatpush.bf16.msra.mxu0 %v108
    %130 = vmatpush.bf16.msra.mxu0 %v107
    %131 = vmatmul.bf16.gmra.mxu0 %v54
    %v132 = vpop.f32.mrf.mxu0
    %v133 = vadd.f32 %v73, %v132
    %v134 = vpop.f32.mrf.mxu0
    %v135 = vadd.f32 %v73, %v134
    %136 = vdwg.mxu0
    %v137 = vmax.f32 %v133, 0.0
    %v138 = vmax.f32 %v135, 0.0
    %v139 = vpack.c.bf16 %v138, %v137
    %v140 = vld [vmem:[#allocation4] sm:$0xf]
    %v141 = vld [vmem:[#allocation4 + $0x4] sm:$0xf]
    %v142 = vld [vmem:[#allocation4 + $0x8] sm:$0xf]
    %v143 = vld [vmem:[#allocation4 + $0xc] sm:$0xf]
    %v144 = vld [vmem:[#allocation4 + $0x10] sm:$0xf]
    %v145 = vld [vmem:[#allocation4 + $0x14] sm:$0xf]
    %v146 = vld [vmem:[#allocation4 + $0x18] sm:$0xf]
    %v147 = vld [vmem:[#allocation4 + $0x1c] sm:$0xf]
    %v148 = vld [vmem:[#allocation4 + $0x20] sm:$0xf]
    %v149 = vld [vmem:[#allocation4 + $0x24] sm:$0xf]
    %v150 = vld [vmem:[#allocation4 + $0x28] sm:$0xf]
    %v151 = vld [vmem:[#allocation4 + $0x2c] sm:$0xf]
    %v152 = vld [vmem:[#allocation4 + $0x30] sm:$0xf]
    %v153 = vld [vmem:[#allocation4 + $0x34] sm:$0xf]
    %v154 = vld [vmem:[#allocation4 + $0x38] sm:$0xf]
    %v155 = vld [vmem:[#allocation4 + $0x3c] sm:$0xf]
    %v172 = vunpack.c.l.b16 %v140
    %v173 = vunpack.c.l.b16 %v141
    %v174 = vunpack.c.l.b16 %v142
    %v175 = vunpack.c.l.b16 %v143
    %v176 = vunpack.c.l.b16 %v144
    %v177 = vunpack.c.l.b16 %v145
    %v178 = vunpack.c.l.b16 %v146
    %v179 = vunpack.c.l.b16 %v147
    %v180 = vunpack.c.l.b16 %v148
    %v181 = vunpack.c.l.b16 %v149
    %v182 = vunpack.c.l.b16 %v150
    %v183 = vunpack.c.l.b16 %v151
    %v184 = vunpack.c.l.b16 %v152
    %v185 = vunpack.c.l.b16 %v153
    %v186 = vunpack.c.l.b16 %v154
    %v187 = vunpack.c.l.b16 %v155
    %v188 = vpack.c.b16 %v173, %v172
    %v189 = vpack.c.b16 %v175, %v174
    %v190 = vpack.c.b16 %v177, %v176
    %v191 = vpack.c.b16 %v179, %v178
    %v192 = vpack.c.b16 %v181, %v180
    %v193 = vpack.c.b16 %v183, %v182
    %v194 = vpack.c.b16 %v185, %v184
    %v195 = vpack.c.b16 %v187, %v186
    %204 = vmatpush.bf16.msra.mxu0 %v195
    %205 = vmatpush.bf16.msra.mxu0 %v194
    %206 = vmatpush.bf16.msra.mxu0 %v193
    %207 = vmatpush.bf16.msra.mxu0 %v192
    %208 = vmatpush.bf16.msra.mxu0 %v191
    %209 = vmatpush.bf16.msra.mxu0 %v190
    %210 = vmatpush.bf16.msra.mxu0 %v189
    %211 = vmatpush.bf16.msra.mxu0 %v188
    %212 = vmatmul.bf16.gmra.mxu0 %v139
    %v213 = vpop.f32.mrf.mxu0
    %v214 = vadd.f32 0.0, %v213
    %v215 = vpop.f32.mrf.mxu0
    %v216 = vadd.f32 0.0, %v215
    %217 = vdwg.mxu0
    %p218 = scmp.eq.s32.totalorder 0, 0
    // Predicated region
    $region30: #{feed_forward.1} parent=1 // pred_check
      %p219 = pneg %p218
    $region31: #{feed_forward.1} parent=1 // pred_check_branch
      %221 = sbr.rel (%p219) target = $region33
    $region32: #{feed_forward.1} parent=1 // pred_region
      %222 = vst [vmem:[%s5] sm:$0xff] %v214
      %223 = vst [vmem:[%s5 + $0x8] sm:$0xff] %v216
    $region33: #{feed_forward.1} parent=1 // pred_fallthru
      _
    %p224 = scmp.gt.s32.totalorder 0, 0
    // Predicated region
    $region34: #{feed_forward.1} parent=1 // pred_check
      %p225 = pneg %p224
    $region35: #{feed_forward.1} parent=1 // pred_check_branch
      %227 = sbr.rel (%p225) target = $region37
    $region36: #{feed_forward.1} parent=1 // pred_region
      %v228 = vld [vmem:[%s5] sm:$0xff]
      %v229 = vld [vmem:[%s5 + $0x8] sm:$0xff]
      %v230 = vadd.f32 %v228, %v214
      %v231 = vadd.f32 %v229, %v216
      %232 = vst [vmem:[%s5] sm:$0xff] %v230
      %233 = vst [vmem:[%s5 + $0x8] sm:$0xff] %v231
    $region37: #{feed_forward.1} parent=1 // pred_fallthru
      _
    // Predicated region
    $region38: #{feed_forward.1} parent=1 // pred_check
      %p234 = pneg %p218
    $region39: #{feed_forward.1} parent=1 // pred_check_branch
      %236 = sbr.rel (%p234) target = $region41
    $region40: #{feed_forward.1} parent=1 // pred_region
      %v237 = vld [vmem:[%s5] sm:$0xff]
      %v238 = vld [vmem:[%s5 + $0x8] sm:$0xff]
      %v239 = vld [vmem:[%s4] sm:$0x1]
      %v241 = vperm.slane %v239, 0
      %v243 = vadd.f32 %v237, %v241
      %v244 = vadd.f32 %v238, %v241
      %245 = vst [vmem:[%s5] sm:$0xff] %v243
      %246 = vst [vmem:[%s5 + $0x8] sm:$0xff] %v244
    $region41: #{feed_forward.1} parent=1 // pred_fallthru
      _
    // Predicated region
    $region42: #{feed_forward.1} parent=1 // pred_check
      _
    $region43: #{feed_forward.1} parent=1 // pred_check_branch
      %248 = sbr.rel (0) target = $region45
    $region44: #{feed_forward.1} parent=1 // pred_region
      _
    $region45: #{feed_forward.1} parent=1 // pred_fallthru
      _
    // Predicated region
    $region46: #{feed_forward.1} parent=1 // pred_check
      _
    $region47: #{feed_forward.1} parent=1 // pred_check_branch
      %250 = sbr.rel (0) target = $region49
    $region48: #{feed_forward.1} parent=1 // pred_region
      _
    $region49: #{feed_forward.1} parent=1 // pred_fallthru
      _
    %251 = vsyncpa [#allocation3], 1
    %252 = vsyncpa [#allocation5], 1

</llo_original>
